<compile_context>
chip_gen: v7x
topology: tpu7x:2x2x1
jax: 0.10.0
libtpu: 0.0.40
codegen_flags: <defaults>
</compile_context>

<pallas_src>
import jax
import jax.numpy as jnp
from jax.experimental import pallas as pl
from jax.experimental.pallas import tpu as pltpu

IGNORE_VALUE = -1.0
DTYPE = jnp.bfloat16     # streaming dtype (exact for labels / >=0 threshold)
LANES = 128              # lane axis width
MAX_TILE_R = 8192        # 8192 x 128 bf16 = 2 MiB per input per grid step


def _round_up(x, m):
    return ((x + m - 1) // m) * m


def _detect_num_cores():
    """2 TensorCores only on v7x; on 1-TC chips (v5e/v6e) the extra axis is a
    pure loss (smaller tiles + extra finalize), so keep it at 1 there."""
    try:
        kind = jax.devices()[0].device_kind.lower()
    except Exception:
        return 1
    return 2 if "v7" in kind else 1


NUM_CORES = _detect_num_cores()


def _metric_kernel(pred_ref, tgt_ref, out_ref, corr_acc, valid_acc):
    """Per (core, row-tile) grid step.

    pred_ref / tgt_ref : (tile_r, 128) bf16 VMEM blocks.
    out_ref            : (1, 2) f32 SMEM block, one row per core:
                           out_ref[0, 0] = n_correct for this core
                           out_ref[0, 1] = n_valid   for this core
    corr_acc/valid_acc : fixed (8, 128) f32 VMEM scratch accumulators
                         (element-wise partials; counts exact up to ~2^24 per
                         accumulator element, i.e. ~1.7e10 elements per core;
                         beyond that the final ratio has ~1e-7 relative error).
    """
    i = pl.program_id(1)

    @pl.when(i == 0)
    def _():
        corr_acc[...] = jnp.zeros_like(corr_acc)
        valid_acc[...] = jnp.zeros_like(valid_acc)

    logits = pred_ref[...]
    tgt = tgt_ref[...]

    # post_act = Sigmoid followed by threshold 0.5:
    #   sigmoid(x) >= 0.5  <=>  x >= 0.0   (transcendental removed, same result)
    # Folded mask math: one compare-of-compares gated by the validity mask.
    valid = tgt != IGNORE_VALUE                      # padding tgt = -1 => never valid
    cmp = (logits >= 0.0) == (tgt >= 0.5)
    correct_f = (cmp & valid).astype(jnp.float32)    # (tile_r, 128)
    valid_f = valid.astype(jnp.float32)

    # Leading-axis partial sum = pure VALU adds into fixed (8,128) accumulators
    # (no per-step XLU reduction, no tile-sized scratch loads/stores).
    corr_acc[...] += correct_f.reshape(-1, 8, LANES).sum(axis=0)
    valid_acc[...] += valid_f.reshape(-1, 8, LANES).sum(axis=0)

    @pl.when(i == pl.num_programs(1) - 1)
    def _():
        # Single cross-lane (XLU) reduction per core, only at the end.
        out_ref[0, 0] = jnp.sum(corr_acc[...])
        out_ref[0, 1] = jnp.sum(valid_acc[...])


def fused_stats(pred_parts, tgt_parts):
    """All-batches-fused statistics.

    pred_parts / tgt_parts: lists of 1-D bf16 arrays (each batch flattened).
    The pad to a full tile grid is folded into the single concatenation
    (target padded with IGNORE_VALUE so padding never counts as valid).
    Returns (n_correct, n_valid) as f32 scalars.
    """
    n = sum(int(p.shape[0]) for p in pred_parts)
    rows = max(1, -(-n // LANES))
    # Largest useful row tile for this problem size (multiple of 16 for bf16
    # sublane packing), capped at MAX_TILE_R.
    tile_r = min(MAX_TILE_R, _round_up(-(-rows // NUM_CORES), 16))
    rows_pad = _round_up(rows, tile_r * NUM_CORES)
    total = rows_pad * LANES
    pad = total - n

    pred_parts = [p.astype(DTYPE) for p in pred_parts]
    tgt_parts = [t.astype(DTYPE) for t in tgt_parts]
    if pad:
        pred_parts = pred_parts + [jnp.zeros((pad,), DTYPE)]
        tgt_parts = tgt_parts + [jnp.full((pad,), IGNORE_VALUE, DTYPE)]
    pred2d = jnp.concatenate(pred_parts).reshape(rows_pad, LANES)
    tgt2d = jnp.concatenate(tgt_parts).reshape(rows_pad, LANES)

    inner = rows_pad // (tile_r * NUM_CORES)

    stats = pl.pallas_call(
        _metric_kernel,
        out_shape=jax.ShapeDtypeStruct((NUM_CORES, 2), jnp.float32),
        grid_spec=pltpu.PrefetchScalarGridSpec(
            num_scalar_prefetch=0,
            grid=(NUM_CORES, inner),
            in_specs=[
                pl.BlockSpec((tile_r, LANES), lambda c, i: (c * inner + i, 0)),
                pl.BlockSpec((tile_r, LANES), lambda c, i: (c * inner + i, 0)),
            ],
            # one (1, 2) SMEM accumulator row per core; resident across inner axis
            out_specs=pl.BlockSpec((1, 2), lambda c, i: (c, 0),
                                   memory_space=pltpu.SMEM),
            scratch_shapes=[
                pltpu.VMEM((8, LANES), jnp.float32),
                pltpu.VMEM((8, LANES), jnp.float32),
            ],
        ),
        compiler_params=pltpu.CompilerParams(
            dimension_semantics=("parallel", "arbitrary"),
            # 2 inputs x 2 buffers x 2 MiB bf16 blocks = 8 MiB + ~8 KiB scratch;
            # well inside v7x's 32 MiB scoped / 64 MiB physical VMEM.
            vmem_limit_bytes=32 * 1024 * 1024,
        ),
    )(pred2d, tgt2d)

    return stats[:, 0].sum(), stats[:, 1].sum()


class CustomMetricPallas:
    """Mirror of CustomMetric(metric_config={'name': 'Accuracy', 'task': 'binary'},
    post_act='Sigmoid'), ignore_target_value=-1.0."""

    def forward(self, list_in_out_batches, pred_key="x", target_key="y",
                ignore_target_value=IGNORE_VALUE):
        if ignore_target_value != IGNORE_VALUE:
            # Kernel is specialized; fail loudly instead of silently being wrong.
            raise ValueError("kernel specialized for ignore_target_value == -1.0")
        preds = [jnp.ravel(b[pred_key]).astype(DTYPE) for b in list_in_out_batches]
        tgts = [jnp.ravel(b[target_key]).astype(DTYPE) for b in list_in_out_batches]

        correct, valid = fused_stats(preds, tgts)
        # torchmetrics returns 0 when no samples were seen (avoid NaN division).
        acc = jnp.where(valid > 0, correct / jnp.maximum(valid, 1.0), 0.0)
        # compute_metric(): .item() -> python float; metric state implicitly reset
        return float(jax.device_get(acc))


def _reference(list_in_out_batches):
    c = 0.0
    t = 0.0
    for b in list_in_out_batches:
        x = b["x"].astype(jnp.float32)
        y = b["y"].astype(jnp.float32)
        prob = jax.nn.sigmoid(x)
        pred_cls = (prob >= 0.5).astype(jnp.float32)
        valid = (y != IGNORE_VALUE).astype(jnp.float32)
        c += float(jnp.sum(jnp.where(pred_cls == y, 1.0, 0.0) * valid))
        t += float(jnp.sum(valid))
    return c / t


if __name__ == "__main__":
    key = jax.random.PRNGKey(0)
    R, C = 16, 128          # small per-batch shape (rows x lane-dim)
    n_batches = 2

    batches = []
    for _ in range(n_batches):
        key, k_logit, k_lab, k_ign = jax.random.split(key, 4)
        logits = jax.random.normal(k_logit, (R, C), dtype=jnp.float32).astype(DTYPE)
        labels = jax.random.bernoulli(k_lab, 0.5, (R, C)).astype(DTYPE)
        ignore = jax.random.bernoulli(k_ign, 0.2, (R, C))
        targets = jnp.where(ignore, jnp.asarray(IGNORE_VALUE, DTYPE), labels)
        batches.append({"x": logits, "y": targets})

    metric = CustomMetricPallas()

    # run the fused kernel once and block on the raw device result
    raw = fused_stats(
        [jnp.ravel(b["x"]) for b in batches],
        [jnp.ravel(b["y"]) for b in batches],
    )
    jax.block_until_ready(raw)

    acc = metric.forward(batches, pred_key="x", target_key="y",
                         ignore_target_value=IGNORE_VALUE)
    ref = _reference(batches)
    assert abs(acc - ref) < 1e-5, (acc, ref)
    print("KERNEL_OK")
</pallas_src>

<mosaic_0001>
module attributes {stable_mosaic.version = 11 : i64} {
  func.func @_metric_kernel(%arg0: i32, %arg1: i32, %arg2: memref<32x128xbf16, #tpu.memory_space<vmem>>, %arg3: memref<32x128xbf16, #tpu.memory_space<vmem>>, %arg4: memref<1x2xf32, #tpu.memory_space<smem>>, %arg5: memref<8x128xf32, #tpu.memory_space<vmem>>, %arg6: memref<8x128xf32, #tpu.memory_space<vmem>>) attributes {dimension_semantics = [#tpu.dimension_semantics<parallel>, #tpu.dimension_semantics<arbitrary>], iteration_bounds = array<i64: 1, 1>, scalar_prefetch = 0 : i64, scratch_operands = 2 : i64, tpu.core_type = #tpu.core_type<tc>, window_params = [{transform_indices = @transform_0, window_bounds = array<i64: 32, 128>}, {transform_indices = @transform_1, window_bounds = array<i64: 32, 128>}, {transform_indices = @transform_2, window_bounds = array<i64: 1, 2>}]} {
    %c0_i32 = arith.constant 0 : i32
    %0 = arith.cmpi eq, %arg1, %c0_i32 : i32
    %1 = arith.extui %0 : i1 to i32
    %c0_i32_0 = arith.constant 0 : i32
    %2 = arith.cmpi ne, %1, %c0_i32_0 : i32
    scf.if %2 {
      %cst_19 = arith.constant 0.000000e+00 : f32
      %31 = vector.broadcast %cst_19 : f32 to vector<8x128xf32>
      %c0_20 = arith.constant 0 : index
      %c0_21 = arith.constant 0 : index
      %32 = vector.load %arg5[%c0_20, %c0_21] : memref<8x128xf32, #tpu.memory_space<vmem>>, vector<8x128xf32>
      tpu.vector_store %arg5[%c0_20, %c0_21], %31 {strides = array<i32>} : memref<8x128xf32, #tpu.memory_space<vmem>>, vector<8x128xf32>,
      %cst_22 = arith.constant 0.000000e+00 : f32
      %33 = vector.broadcast %cst_22 : f32 to vector<8x128xf32>
      %c0_23 = arith.constant 0 : index
      %c0_24 = arith.constant 0 : index
      %34 = vector.load %arg6[%c0_23, %c0_24] : memref<8x128xf32, #tpu.memory_space<vmem>>, vector<8x128xf32>
      tpu.vector_store %arg6[%c0_23, %c0_24], %33 {strides = array<i32>} : memref<8x128xf32, #tpu.memory_space<vmem>>, vector<8x128xf32>,
    } else {
    }
    %c0 = arith.constant 0 : index
    %c0_1 = arith.constant 0 : index
    %3 = vector.load %arg2[%c0, %c0_1] : memref<32x128xbf16, #tpu.memory_space<vmem>>, vector<32x128xbf16>
    %c0_2 = arith.constant 0 : index
    %c0_3 = arith.constant 0 : index
    %4 = vector.load %arg3[%c0_2, %c0_3] : memref<32x128xbf16, #tpu.memory_space<vmem>>, vector<32x128xbf16>
    %cst = arith.constant -1.000000e+00 : bf16
    %5 = vector.broadcast %cst : bf16 to vector<32x128xbf16>
    %6 = arith.cmpf one, %4, %5 : vector<32x128xbf16>
    %cst_4 = arith.constant 0.000000e+00 : bf16
    %7 = vector.broadcast %cst_4 : bf16 to vector<32x128xbf16>
    %8 = arith.cmpf oge, %3, %7 : vector<32x128xbf16>
    %cst_5 = arith.constant 5.000000e-01 : bf16
    %9 = vector.broadcast %cst_5 : bf16 to vector<32x128xbf16>
    %10 = arith.cmpf oge, %4, %9 : vector<32x128xbf16>
    %11 = arith.xori %8, %10 : vector<32x128xi1>
    %cst_6 = arith.constant dense<true> : vector<32x128xi1>
    %12 = arith.xori %11, %cst_6 : vector<32x128xi1>
    %13 = arith.andi %12, %6 : vector<32x128xi1>
    %14 = arith.extui %13 : vector<32x128xi1> to vector<32x128xi32>
    %15 = arith.sitofp %14 : vector<32x128xi32> to vector<32x128xf32>
    %16 = arith.extui %6 : vector<32x128xi1> to vector<32x128xi32>
    %17 = arith.sitofp %16 : vector<32x128xi32> to vector<32x128xf32>
    %c0_7 = arith.constant 0 : index
    %c0_8 = arith.constant 0 : index
    %18 = vector.load %arg5[%c0_7, %c0_8] : memref<8x128xf32, #tpu.memory_space<vmem>>, vector<8x128xf32>
    %19 = vector.shape_cast %15 : vector<32x128xf32> to vector<4x8x128xf32>
    %cst_9 = arith.constant dense<0.000000e+00> : vector<8x128xf32>
    %20 = vector.multi_reduction <add>, %19, %cst_9 [0] : vector<4x8x128xf32> to vector<8x128xf32>
    %21 = arith.addf %18, %20 : vector<8x128xf32>
    %c0_10 = arith.constant 0 : index
    %c0_11 = arith.constant 0 : index
    %22 = vector.load %arg5[%c0_10, %c0_11] : memref<8x128xf32, #tpu.memory_space<vmem>>, vector<8x128xf32>
    tpu.vector_store %arg5[%c0_10, %c0_11], %21 {strides = array<i32>} : memref<8x128xf32, #tpu.memory_space<vmem>>, vector<8x128xf32>,
    %c0_12 = arith.constant 0 : index
    %c0_13 = arith.constant 0 : index
    %23 = vector.load %arg6[%c0_12, %c0_13] : memref<8x128xf32, #tpu.memory_space<vmem>>, vector<8x128xf32>
    %24 = vector.shape_cast %17 : vector<32x128xf32> to vector<4x8x128xf32>
    %cst_14 = arith.constant dense<0.000000e+00> : vector<8x128xf32>
    %25 = vector.multi_reduction <add>, %24, %cst_14 [0] : vector<4x8x128xf32> to vector<8x128xf32>
    %26 = arith.addf %23, %25 : vector<8x128xf32>
    %c0_15 = arith.constant 0 : index
    %c0_16 = arith.constant 0 : index
    %27 = vector.load %arg6[%c0_15, %c0_16] : memref<8x128xf32, #tpu.memory_space<vmem>>, vector<8x128xf32>
    tpu.vector_store %arg6[%c0_15, %c0_16], %26 {strides = array<i32>} : memref<8x128xf32, #tpu.memory_space<vmem>>, vector<8x128xf32>,
    %c0_i32_17 = arith.constant 0 : i32
    %28 = arith.cmpi eq, %arg1, %c0_i32_17 : i32
    %29 = arith.extui %28 : i1 to i32
    %c0_i32_18 = arith.constant 0 : i32
    %30 = arith.cmpi ne, %29, %c0_i32_18 : i32
    scf.if %30 {
      %c0_19 = arith.constant 0 : index
      %c0_20 = arith.constant 0 : index
      %31 = vector.load %arg5[%c0_19, %c0_20] : memref<8x128xf32, #tpu.memory_space<vmem>>, vector<8x128xf32>
      %32 = vector.shape_cast %31 : vector<8x128xf32> to vector<1x8x128xf32>
      %cst_21 = arith.constant dense<0.000000e+00> : vector<1xf32>
      %33 = vector.multi_reduction <add>, %32, %cst_21 [1, 2] : vector<1x8x128xf32> to vector<1xf32>
      %34 = vector.shape_cast %33 : vector<1xf32> to vector<1x1x1xf32>
      %35 = vector.extract %34[0, 0, 0] : f32 from vector<1x1x1xf32>
      %c0_22 = arith.constant 0 : index
      %c0_23 = arith.constant 0 : index
      %36 = memref.load %arg4[%c0_22, %c0_23] : memref<1x2xf32, #tpu.memory_space<smem>>
      memref.store %35, %arg4[%c0_22, %c0_23] : memref<1x2xf32, #tpu.memory_space<smem>>
      %c0_24 = arith.constant 0 : index
      %c0_25 = arith.constant 0 : index
      %37 = vector.load %arg6[%c0_24, %c0_25] : memref<8x128xf32, #tpu.memory_space<vmem>>, vector<8x128xf32>
      %38 = vector.shape_cast %37 : vector<8x128xf32> to vector<1x8x128xf32>
      %cst_26 = arith.constant dense<0.000000e+00> : vector<1xf32>
      %39 = vector.multi_reduction <add>, %38, %cst_26 [1, 2] : vector<1x8x128xf32> to vector<1xf32>
      %40 = vector.shape_cast %39 : vector<1xf32> to vector<1x1x1xf32>
      %41 = vector.extract %40[0, 0, 0] : f32 from vector<1x1x1xf32>
      %c0_27 = arith.constant 0 : index
      %c1 = arith.constant 1 : index
      %42 = memref.load %arg4[%c0_27, %c1] : memref<1x2xf32, #tpu.memory_space<smem>>
      memref.store %41, %arg4[%c0_27, %c1] : memref<1x2xf32, #tpu.memory_space<smem>>
    } else {
    }
    return
  }
  func.func @transform_0(%arg0: i32, %arg1: i32) -> (i32, i32) {
    %c1_i32 = arith.constant 1 : i32
    %0 = arith.muli %arg0, %c1_i32 : i32
    %1 = arith.addi %0, %arg1 : i32
    %c0_i32 = arith.constant 0 : i32
    %c0_i32_0 = arith.constant 0 : i32
    return %1, %c0_i32 : i32, i32
  }
  func.func @transform_1(%arg0: i32, %arg1: i32) -> (i32, i32) {
    %c1_i32 = arith.constant 1 : i32
    %0 = arith.muli %arg0, %c1_i32 : i32
    %1 = arith.addi %0, %arg1 : i32
    %c0_i32 = arith.constant 0 : i32
    %c0_i32_0 = arith.constant 0 : i32
    return %1, %c0_i32 : i32, i32
  }
  func.func @transform_2(%arg0: i32, %arg1: i32) -> (i32, i32) {
    %c0_i32 = arith.constant 0 : i32
    %c0_i32_0 = arith.constant 0 : i32
    return %arg0, %c0_i32 : i32, i32
  }
}

</mosaic_0001>

<llo_original>
// kernel: tpu_custom_call.1
$region0: #{tpu_custom_call.1}
  #allocation0 [shape = 'u32[]', space=smem, size = 0x4, offset = 0x4, fixed_abs, tag = 'smem constant byte address 0x4 - core index']
  #allocation1 [shape = 'u32[144,128]{1,0:T(1,128)}', space=vmem, size = 0x12000, scoped, tag = 'internal scratch']
  #allocation2 [shape = 'f32[8,128]{1,0:T(8,128)}', space=vmem, size = 0x1000, scoped, tag = 'scratch operand']
  #allocation3 [shape = 'f32[8,128]{1,0:T(8,128)}', space=vmem, size = 0x1000, scoped, tag = 'scratch operand']
  %s0 = inlined_call_operand.hbm [shape: bf16[32,128], index: 0, kind: input, shape index: {}]
  %s1 = inlined_call_operand.hbm [shape: bf16[32,128], index: 1, kind: input, shape index: {}]
  %s2 = inlined_call_operand.hbm [shape: f32[1,2], index: 2, kind: output, shape index: {}]
  %s3 = sld [smem:[#allocation0]]
  $region34: #{tpu_custom_call.1} parent=0
    _
  %s5 = ssub.s32 1, %s3
  %s6 = scalar_select 0, %s5, %s3
  $region1: #{tpu_custom_call.1} parent=0
    #allocation4 [shape = 'u8[8192]{0}', space=vmem, size = 0x2000, scoped, tag = 'input window, operand 0, single buffered']
    #allocation5 [shape = 's32[1]{0}', space=sflag, size = 0x4, scoped, tag = 'scoped memory for tpu_custom_call.1']
    #allocation6 [shape = 's32[1]{0}', space=sflag, size = 0x4, scoped, tag = 'scoped memory for tpu_custom_call.1']
    #allocation7 [shape = 'u8[8192]{0}', space=vmem, size = 0x2000, scoped, tag = 'input window, operand 1, single buffered']
    #allocation8 [shape = 's32[1]{0}', space=sflag, size = 0x4, scoped, tag = 'scoped memory for tpu_custom_call.1']
    #allocation9 [shape = 'u8[512]{0}', space=smem, size = 0x200, scoped, tag = 'output window, operand 0, single buffered']
    %7 = vsyncpa [#allocation5], 0
    %8 = vsyncpa [#allocation8], 0
    %9 = vsyncpa [#allocation6], 0
    // Predicated region
    $region2: #{tpu_custom_call.1} parent=1 // pred_check
      _
    $region3: #{tpu_custom_call.1} parent=1 // pred_check_branch
      %11 = sbr.rel (0) target = $region5
    $region4: #{tpu_custom_call.1} parent=1 // pred_region
      %s12 = sadd.s32 0, 0
      %s13 = smul.u32 4, %s12
      %s15 = ssub.s32 256, 256
      %16 = vsyncadd [#allocation5], %s15
      %s17 = smul.addr %s13, 64
      %s18 = scalar_lea.hbm %s0, %s17
      %s19 = sshll.u32 [#allocation4], 4
      %s20 = int_to_ptr.vmem [resolvable:$true] %s19
      %25 = dma.hbm_to_vmem [thread:$0]  %s18, 256, %s20, [#allocation5], 64, 64, 4
    $region5: #{tpu_custom_call.1} parent=1 // pred_fallthru
      _
    // Predicated region
    $region6: #{tpu_custom_call.1} parent=1 // pred_check
      _
    $region7: #{tpu_custom_call.1} parent=1 // pred_check_branch
      %27 = sbr.rel (0) target = $region9
    $region8: #{tpu_custom_call.1} parent=1 // pred_region
      %s28 = sadd.s32 0, 0
      %s29 = smul.u32 4, %s28
      %s31 = ssub.s32 256, 256
      %32 = vsyncadd [#allocation8], %s31
      %s33 = smul.addr %s29, 64
      %s34 = scalar_lea.hbm %s1, %s33
      %s35 = sshll.u32 [#allocation7], 4
      %s36 = int_to_ptr.vmem [resolvable:$true] %s35
      %41 = dma.hbm_to_vmem [thread:$0]  %s34, 256, %s36, [#allocation8], 64, 64, 4
    $region9: #{tpu_custom_call.1} parent=1 // pred_fallthru
      _
    // Predicated region
    $region10: #{tpu_custom_call.1} parent=1 // pred_check
      _
    $region11: #{tpu_custom_call.1} parent=1 // pred_check_branch
      %43 = sbr.rel (0) target = $region13
    $region12: #{tpu_custom_call.1} parent=1 // pred_region
      %44 = dma.done [#allocation5], 256
    $region13: #{tpu_custom_call.1} parent=1 // pred_fallthru
      _
    // Predicated region
    $region14: #{tpu_custom_call.1} parent=1 // pred_check
      _
    $region15: #{tpu_custom_call.1} parent=1 // pred_check_branch
      %46 = sbr.rel (0) target = $region17
    $region16: #{tpu_custom_call.1} parent=1 // pred_region
      %47 = dma.done [#allocation8], 256
    $region17: #{tpu_custom_call.1} parent=1 // pred_fallthru
      _
    %s48 = sadd.s32 0, 0
    %s49 = smul.u32 4, %s48
    %s50 = sadd.s32 0, 0
    %s51 = smul.u32 4, %s50
    %p57 = scmp.eq.s32.totalorder 0, 0
    // Predicated region
    $region18: #{tpu_custom_call.1} parent=1 // pred_check
      %p58 = pneg %p57
    $region19: #{tpu_custom_call.1} parent=1 // pred_check_branch
      %60 = sbr.rel (%p58) target = $region21
    $region20: #{tpu_custom_call.1} parent=1 // pred_region
      %61 = vst [vmem:[#allocation2] sm:$0xff] 0.0
      %62 = vst [vmem:[#allocation3] sm:$0xff] 0.0
    $region21: #{tpu_custom_call.1} parent=1 // pred_fallthru
      _
    %v63 = vld [vmem:[#allocation4] sm:$0xf]
    %v64 = vld [vmem:[#allocation4 + $0x4] sm:$0xf]
    %v65 = vld [vmem:[#allocation4 + $0x8] sm:$0xf]
    %v66 = vld [vmem:[#allocation4 + $0xc] sm:$0xf]
    %v67 = vld [vmem:[#allocation7] sm:$0xf]
    %v68 = vld [vmem:[#allocation7 + $0x4] sm:$0xf]
    %v69 = vld [vmem:[#allocation7 + $0x8] sm:$0xf]
    %v70 = vld [vmem:[#allocation7 + $0xc] sm:$0xf]
    %vm71 = vcmp.ne.bf16.partialorder %v67, 3212885888
    %vm72 = vcmp.ne.bf16.partialorder %v68, 3212885888
    %vm73 = vcmp.ne.bf16.partialorder %v69, 3212885888
    %vm74 = vcmp.ne.bf16.partialorder %v70, 3212885888
    %vm75 = vcmp.ge.bf16.partialorder %v63, 0
    %vm76 = vcmp.ge.bf16.partialorder %v64, 0
    %vm77 = vcmp.ge.bf16.partialorder %v65, 0
    %vm78 = vcmp.ge.bf16.partialorder %v66, 0
    %vm79 = vcmp.ge.bf16.partialorder %v67, 1056980736
    %vm80 = vcmp.ge.bf16.partialorder %v68, 1056980736
    %vm81 = vcmp.ge.bf16.partialorder %v69, 1056980736
    %vm82 = vcmp.ge.bf16.partialorder %v70, 1056980736
    %vm83 = vmxor %vm75, %vm79
    %vm84 = vmxor %vm76, %vm80
    %vm85 = vmxor %vm77, %vm81
    %vm86 = vmxor %vm78, %vm82
    %vm87 = vmxor %vm83, 1
    %vm88 = vmxor %vm84, 1
    %vm89 = vmxor %vm85, 1
    %vm90 = vmxor %vm86, 1
    %vm91 = vmand %vm87, %vm71
    %vm92 = vmand %vm88, %vm72
    %vm93 = vmand %vm89, %vm73
    %vm94 = vmand %vm90, %vm74
    %v95 = vsel %vm91, 65537, 0
    %v96 = vsel %vm92, 65537, 0
    %v97 = vsel %vm93, 65537, 0
    %v98 = vsel %vm94, 65537, 0
    %v99 = vunpack.c.l.b16 %v95
    %v100 = vunpack.c.l.b16 %v96
    %v101 = vunpack.c.l.b16 %v97
    %v102 = vunpack.c.l.b16 %v98
    %vm103 = vcmp.ne.s32.totalorder %v99, 0
    %vm104 = vcmp.ne.s32.totalorder %v100, 0
    %vm105 = vcmp.ne.s32.totalorder %v101, 0
    %vm106 = vcmp.ne.s32.totalorder %v102, 0
    %v107 = vsel %vm103, 1, 0
    %v108 = vsel %vm104, 1, 0
    %v109 = vsel %vm105, 1, 0
    %v110 = vsel %vm106, 1, 0
    %v111 = vcvt.s32.f32 %v107
    %v112 = vcvt.s32.f32 %v108
    %v113 = vcvt.s32.f32 %v109
    %v114 = vcvt.s32.f32 %v110
    %v115 = vsel %vm71, 65537, 0
    %v116 = vsel %vm72, 65537, 0
    %v117 = vsel %vm73, 65537, 0
    %v118 = vsel %vm74, 65537, 0
    %v119 = vunpack.c.l.b16 %v115
    %v120 = vunpack.c.l.b16 %v116
    %v121 = vunpack.c.l.b16 %v117
    %v122 = vunpack.c.l.b16 %v118
    %vm123 = vcmp.ne.s32.totalorder %v119, 0
    %vm124 = vcmp.ne.s32.totalorder %v120, 0
    %vm125 = vcmp.ne.s32.totalorder %v121, 0
    %vm126 = vcmp.ne.s32.totalorder %v122, 0
    %v127 = vsel %vm123, 1, 0
    %v128 = vsel %vm124, 1, 0
    %v129 = vsel %vm125, 1, 0
    %v130 = vsel %vm126, 1, 0
    %v131 = vcvt.s32.f32 %v127
    %v132 = vcvt.s32.f32 %v128
    %v133 = vcvt.s32.f32 %v129
    %v134 = vcvt.s32.f32 %v130
    %v135 = vld [vmem:[#allocation2] sm:$0xff]
    %v136 = vadd.f32 %v111, %v112
    %v137 = vadd.f32 %v136, %v113
    %v138 = vadd.f32 %v137, %v114
    %v139 = vadd.f32 %v135, %v138
    %140 = vst [vmem:[#allocation2] sm:$0xff] %v139
    %v141 = vld [vmem:[#allocation3] sm:$0xff]
    %v142 = vadd.f32 %v131, %v132
    %v143 = vadd.f32 %v142, %v133
    %v144 = vadd.f32 %v143, %v134
    %v145 = vadd.f32 %v141, %v144
    %146 = vst [vmem:[#allocation3] sm:$0xff] %v145
    // Predicated region
    $region22: #{tpu_custom_call.1} parent=1 // pred_check
      %p147 = pneg %p57
    $region23: #{tpu_custom_call.1} parent=1 // pred_check_branch
      %149 = sbr.rel (%p147) target = $region25
    $region24: #{tpu_custom_call.1} parent=1 // pred_region
      %v150 = vld [vmem:[#allocation2] sm:$0xff]
      %151 = vadd.xlane.f32.xlu0 %v150
      %v152 = vpop.xlane.xlu0 %151
      %v153 = vrot.slane %v152, 4
      %v154 = vadd.f32 %v152, %v153
      %v155 = vrot.slane %v154, 2
      %v156 = vadd.f32 %v154, %v155
      %v157 = vrot.slane %v156, 1
      %v158 = vadd.f32 %v156, %v157
      %s159 = vtos %v158
      %s160 = scalar_lea.smem [#allocation9], 0
      %161 = sst [smem:[%s160]] %s159
      %v162 = vld [vmem:[#allocation3] sm:$0xff]
      %163 = vadd.xlane.f32.xlu0 %v162
      %v164 = vpop.xlane.xlu0 %163
      %v165 = vrot.slane %v164, 4
      %v166 = vadd.f32 %v164, %v165
      %v167 = vrot.slane %v166, 2
      %v168 = vadd.f32 %v166, %v167
      %v169 = vrot.slane %v168, 1
      %v170 = vadd.f32 %v168, %v169
      %s171 = vtos %v170
      %s172 = scalar_lea.smem [#allocation9], 1
      %173 = sst [smem:[%s172]] %s171
    $region25: #{tpu_custom_call.1} parent=1 // pred_fallthru
      _
    // Predicated region
    $region26: #{tpu_custom_call.1} parent=1 // pred_check
      _
    $region27: #{tpu_custom_call.1} parent=1 // pred_check_branch
      %175 = sbr.rel (0) target = $region29
    $region28: #{tpu_custom_call.1} parent=1 // pred_region
      %s177 = ssub.s32 16, 16
      %178 = vsyncadd [#allocation6], %s177
      %181 = dma.smem_to_hbm [#allocation9], 16, %s2, [#allocation6]
    $region29: #{tpu_custom_call.1} parent=1 // pred_fallthru
      _
    // Predicated region
    $region30: #{tpu_custom_call.1} parent=1 // pred_check
      _
    $region31: #{tpu_custom_call.1} parent=1 // pred_check_branch
      %183 = sbr.rel (0) target = $region33
    $region32: #{tpu_custom_call.1} parent=1 // pred_region
      %184 = dma.done [#allocation6], 16
    $region33: #{tpu_custom_call.1} parent=1 // pred_fallthru
      _
    %185 = sfence
    %186 = vsyncpa [#allocation5], 1
    %187 = vsyncpa [#allocation8], 1
    %188 = vsyncpa [#allocation6], 1

</llo_original>
